<compile_context>
chip_gen: v7x
topology: tpu7x:2x2x1
jax: 0.10.0
libtpu: 0.0.40
codegen_flags: <defaults>
</compile_context>

<pallas_src>
import functools

import jax
import jax.numpy as jnp
from jax.experimental import pallas as pl
from jax.experimental.pallas import tpu as pltpu

_LANE = 128          # TPU lane width (last dim)
_SUB = 8             # TPU sublane width (second-to-last dim)
_DEF_TILE_B = 256    # batch tile for the gridded (large-batch) path


# ----------------------------- Pallas kernels ------------------------------


def _fwd_from_padded(x_pad, w_ref):
    """Three fused MXU matmuls on an already padded + bias-augmented tile.

    x_pad : (rows, 128) f32 — features in lanes [0, F), ones-lane at lane F.
    w_ref : (128, 384) bf16 — [ fc1_aug | fc2_aug | head_aug ] slab.
    Biases ride in via the ones-lane, which the slab re-emits as 1.0 for the
    hidden tiles, so no explicit bias adds are needed anywhere.
    """
    wdt = w_ref.dtype
    h1 = jnp.dot(x_pad.astype(wdt), w_ref[:, 0:_LANE],
                 preferred_element_type=jnp.float32)
    h1 = jnp.maximum(h1, 0.0)                       # ReLU(fc1); ones-lane stays 1
    h2 = jnp.dot(h1.astype(wdt), w_ref[:, _LANE:2 * _LANE],
                 preferred_element_type=jnp.float32)
    h2 = jnp.maximum(h2, 0.0)                       # ReLU(fc2); ones-lane stays 1
    return jnp.dot(h2.astype(wdt), w_ref[:, 2 * _LANE:3 * _LANE],
                   preferred_element_type=jnp.float32)


def _agent_kernel_small(x_ref, w_ref, out_ref, xs_ref, *, batch, feat):
    """Per-step path: un-padded x, zero-fill done in VMEM (no host pad op).

    x_ref  : (batch, feat) f32 raw observations
    w_ref  : (128, 384)   bf16 packed/augmented parameter slab
    out_ref: (Bp, 128)    f32, cols [0, n_actions) = q, col n_actions = v
    xs_ref : (Bp, 128)    f32 scratch holding the padded, augmented x tile
    """
    col = jax.lax.broadcasted_iota(jnp.int32, xs_ref.shape, 1)
    xs_ref[...] = jnp.where(col == feat, 1.0, 0.0)      # zeros + ones-lane
    xs_ref[0:batch, 0:feat] = x_ref[...]                 # drop raw obs in
    out_ref[...] = _fwd_from_padded(xs_ref[...], w_ref)


def _agent_kernel_tiled(x_ref, w_ref, out_ref, *, feat):
    """Gridded path: x already padded to (TILE_B, 128); set ones-lane in-kernel."""
    col = jax.lax.broadcasted_iota(jnp.int32, x_ref.shape, 1)
    x = jnp.where(col == feat, 1.0, x_ref[...])
    out_ref[...] = _fwd_from_padded(x, w_ref)


# ------------------------------ Host wrappers ------------------------------


def _round_up(n, m):
    return ((n + m - 1) // m) * m


def prepare_params(params, dtype=jnp.bfloat16):
    """Pack + bias-augment ALL parameters into ONE (128, 384) slab.

    Call once per parameter update (outside the per-step path).
    Weights are stored (in_features, out_features).  Layout:
      cols [  0,128): fc1 W ; row F = fc1 b ; slab[F, H]        = 1  (ones-lane)
      cols [128,256): fc2 W ; row H = fc2 b ; slab[H, 128 + H]  = 1  (ones-lane)
      cols [256,384): [actor | critic] W ; row H = [actor b | critic b]
    """
    w1, b1, w2, b2, wa, ba, wc, bc = [jnp.asarray(p, jnp.float32) for p in params]
    F, H = w1.shape
    n_actions = wa.shape[1]
    assert F + 1 <= _LANE and H + 1 <= _LANE and n_actions + 1 <= _LANE, \
        "feature/hidden/output dims (+1 ones-lane) must fit in a 128-lane tile"

    slab = jnp.zeros((_LANE, 3 * _LANE), jnp.float32)
    # fc1 (+ folded bias + ones-lane pass-through)
    slab = slab.at[:F, :H].set(w1)
    slab = slab.at[F, :H].set(b1)
    slab = slab.at[F, H].set(1.0)
    # fc2 (+ folded bias + ones-lane pass-through)
    slab = slab.at[:H, _LANE:_LANE + H].set(w2)
    slab = slab.at[H, _LANE:_LANE + H].set(b2)
    slab = slab.at[H, _LANE + H].set(1.0)
    # fused actor|critic head (+ folded biases)
    w_head = jnp.concatenate([wa, wc], axis=1)            # (H, n_actions + 1)
    b_head = jnp.concatenate([ba, bc], axis=0)            # (n_actions + 1,)
    slab = slab.at[:H, 2 * _LANE:2 * _LANE + n_actions + 1].set(w_head)
    slab = slab.at[H, 2 * _LANE:2 * _LANE + n_actions + 1].set(b_head)
    return slab.astype(dtype)


@functools.partial(jax.jit, static_argnames=("batch_tile",))
def actor_critic_forward(x, w_slab, *, batch_tile=_DEF_TILE_B):
    """Forward pass.  x: (B, input_shape) f32, w_slab: (128, 384) from prepare_params.

    Returns the raw lane-dense (Bp, 128) f32 output slab:
        q = out[:B, :n_actions],  v = out[:B, n_actions:n_actions + 1]
    (the consumer indexes / fuses the slicing; nothing extra in this path).
    """
    B, F = x.shape
    vmem = pl.BlockSpec(memory_space=pltpu.MemorySpace.VMEM)

    if B <= batch_tile:
        # Per-step path: single VMEM-resident invocation, no grid, no host pad.
        Bp = _round_up(max(B, _SUB), _SUB)
        return pl.pallas_call(
            functools.partial(_agent_kernel_small, batch=B, feat=F),
            out_shape=jax.ShapeDtypeStruct((Bp, _LANE), jnp.float32),
            in_specs=[vmem, vmem],
            out_specs=vmem,
            scratch_shapes=[pltpu.VMEM((Bp, _LANE), jnp.float32)],
        )(x, w_slab)

    # Large-batch path: 1-D batch grid; weights pinned via constant index_map;
    # batch axis "parallel" (shards across the 2 TensorCores on v7x).
    Bp = _round_up(B, batch_tile)
    x_p = jnp.pad(x, ((0, Bp - B), (0, _LANE - F)))
    return pl.pallas_call(
        functools.partial(_agent_kernel_tiled, feat=F),
        out_shape=jax.ShapeDtypeStruct((Bp, _LANE), jnp.float32),
        grid=(Bp // batch_tile,),
        in_specs=[pl.BlockSpec((batch_tile, _LANE), lambda i: (i, 0)),
                  pl.BlockSpec((_LANE, 3 * _LANE), lambda i: (0, 0))],
        out_specs=pl.BlockSpec((batch_tile, _LANE), lambda i: (i, 0)),
        compiler_params=pltpu.CompilerParams(
            dimension_semantics=("parallel",)),
    )(x_p, w_slab)


# ------------------------------- Init / ref --------------------------------


def init_params(key, input_shape, n_actions, hidden=10):
    """Deterministic PyTorch-Linear-style init (U(-1/sqrt(fan_in), +))."""
    def linear(k, fan_in, fan_out):
        kw, kb = jax.random.split(k)
        bound = 1.0 / jnp.sqrt(float(fan_in))
        w = jax.random.uniform(kw, (fan_in, fan_out), jnp.float32, -bound, bound)
        b = jax.random.uniform(kb, (fan_out,), jnp.float32, -bound, bound)
        return w, b

    k1, k2, k3, k4 = jax.random.split(key, 4)
    w1, b1 = linear(k1, input_shape, hidden)
    w2, b2 = linear(k2, hidden, hidden)
    wa, ba = linear(k3, hidden, n_actions)
    wc, bc = linear(k4, hidden, 1)
    return (w1, b1, w2, b2, wa, ba, wc, bc)


def reference_forward(x, params):
    w1, b1, w2, b2, wa, ba, wc, bc = params
    h = jnp.maximum(x @ w1 + b1, 0.0)
    h = jnp.maximum(h @ w2 + b2, 0.0)
    return h @ wa + ba, h @ wc + bc


if __name__ == "__main__":
    INPUT_SHAPE = 4   # CartPole observation dim
    N_ACTIONS = 2     # CartPole action space
    BATCH = 2

    key = jax.random.PRNGKey(0)
    k_params, k_x, k_xl = jax.random.split(key, 3)
    params = init_params(k_params, INPUT_SHAPE, N_ACTIONS)
    w_slab = prepare_params(params)            # once per parameter update
    jax.block_until_ready(w_slab)

    # --- per-step (small batch) path ---------------------------------------
    x = jax.random.normal(k_x, (BATCH, INPUT_SHAPE), jnp.float32)
    out = actor_critic_forward(x, w_slab)
    jax.block_until_ready(out)
    q = out[:BATCH, :N_ACTIONS]
    v = out[:BATCH, N_ACTIONS:N_ACTIONS + 1]

    q_ref, v_ref = reference_forward(x, params)
    assert q.shape == (BATCH, N_ACTIONS) and v.shape == (BATCH, 1)
    # bf16 weights -> loosened tolerance vs the f32 reference.
    assert jnp.allclose(q, q_ref, rtol=5e-2, atol=5e-2), "actor head mismatch"
    assert jnp.allclose(v, v_ref, rtol=5e-2, atol=5e-2), "critic head mismatch"

    # --- large-batch (gridded, megacore-parallel) path ----------------------
    BIG = 1024
    xl = jax.random.normal(k_xl, (BIG, INPUT_SHAPE), jnp.float32)
    out_l = actor_critic_forward(xl, w_slab)
    jax.block_until_ready(out_l)
    ql = out_l[:BIG, :N_ACTIONS]
    vl = out_l[:BIG, N_ACTIONS:N_ACTIONS + 1]
    ql_ref, vl_ref = reference_forward(xl, params)
    assert jnp.allclose(ql, ql_ref, rtol=5e-2, atol=5e-2), "actor head mismatch (gridded)"
    assert jnp.allclose(vl, vl_ref, rtol=5e-2, atol=5e-2), "critic head mismatch (gridded)"

    print("KERNEL_OK")
</pallas_src>

<mosaic_0001>
module attributes {stable_mosaic.version = 11 : i64} {
  func.func @_agent_kernel_small(%arg0: memref<2x4xf32, #tpu.memory_space<vmem>>, %arg1: memref<128x384xbf16, #tpu.memory_space<vmem>>, %arg2: memref<8x128xf32, #tpu.memory_space<vmem>>, %arg3: memref<8x128xf32, #tpu.memory_space<vmem>>) attributes {dimension_semantics = [], scalar_prefetch = 0 : i64, scratch_operands = 1 : i64, tpu.core_type = #tpu.core_type<tc>} {
    %0 = tpu.iota {dimensions = array<i32: 1>} : vector<8x128xi32>
    %c4_i32 = arith.constant 4 : i32
    %1 = vector.broadcast %c4_i32 : i32 to vector<8x128xi32>
    %2 = arith.cmpi eq, %0, %1 : vector<8x128xi32>
    %cst = arith.constant 1.000000e+00 : f32
    %cst_0 = arith.constant 0.000000e+00 : f32
    %3 = vector.broadcast %cst : f32 to vector<8x128xf32>
    %4 = vector.broadcast %cst_0 : f32 to vector<8x128xf32>
    %5 = arith.select %2, %3, %4 : vector<8x128xi1>, vector<8x128xf32>
    %c0 = arith.constant 0 : index
    %c0_1 = arith.constant 0 : index
    %6 = vector.load %arg3[%c0, %c0_1] : memref<8x128xf32, #tpu.memory_space<vmem>>, vector<8x128xf32>
    tpu.vector_store %arg3[%c0, %c0_1], %5 {strides = array<i32>} : memref<8x128xf32, #tpu.memory_space<vmem>>, vector<8x128xf32>,
    %c0_2 = arith.constant 0 : index
    %c0_3 = arith.constant 0 : index
    %7 = vector.load %arg0[%c0_2, %c0_3] : memref<2x4xf32, #tpu.memory_space<vmem>>, vector<2x4xf32>
    %c0_4 = arith.constant 0 : index
    %c0_5 = arith.constant 0 : index
    %8 = vector.load %arg3[%c0_4, %c0_5] : memref<8x128xf32, #tpu.memory_space<vmem>>, vector<2x4xf32>
    tpu.vector_store %arg3[%c0_4, %c0_5], %7 {strides = array<i32>} : memref<8x128xf32, #tpu.memory_space<vmem>>, vector<2x4xf32>,
    %c0_6 = arith.constant 0 : index
    %c0_7 = arith.constant 0 : index
    %9 = vector.load %arg3[%c0_6, %c0_7] : memref<8x128xf32, #tpu.memory_space<vmem>>, vector<8x128xf32>
    %10 = arith.truncf %9 : vector<8x128xf32> to vector<8x128xbf16>
    %c0_8 = arith.constant 0 : index
    %c0_9 = arith.constant 0 : index
    %11 = vector.load %arg1[%c0_8, %c0_9] : memref<128x384xbf16, #tpu.memory_space<vmem>>, vector<128x128xbf16>
    %cst_10 = arith.constant dense<0.000000e+00> : vector<8x128xf32>
    %12 = tpu.matmul %10, %11, %cst_10 {dimension_numbers = #tpu.dot_dimension_numbers<[1], [0], [0], [1], [0, 0, 1, 1], [], []>} : vector<8x128xbf16>, vector<128x128xbf16>, vector<8x128xf32> -> vector<8x128xf32>
    %cst_11 = arith.constant 0.000000e+00 : f32
    %13 = vector.broadcast %cst_11 : f32 to vector<8x128xf32>
    %14 = arith.maximumf %12, %13 : vector<8x128xf32>
    %15 = arith.truncf %14 : vector<8x128xf32> to vector<8x128xbf16>
    %c0_12 = arith.constant 0 : index
    %c128 = arith.constant 128 : index
    %16 = vector.load %arg1[%c0_12, %c128] : memref<128x384xbf16, #tpu.memory_space<vmem>>, vector<128x128xbf16>
    %cst_13 = arith.constant dense<0.000000e+00> : vector<8x128xf32>
    %17 = tpu.matmul %15, %16, %cst_13 {dimension_numbers = #tpu.dot_dimension_numbers<[1], [0], [0], [1], [0, 0, 1, 1], [], []>} : vector<8x128xbf16>, vector<128x128xbf16>, vector<8x128xf32> -> vector<8x128xf32>
    %cst_14 = arith.constant 0.000000e+00 : f32
    %18 = vector.broadcast %cst_14 : f32 to vector<8x128xf32>
    %19 = arith.maximumf %17, %18 : vector<8x128xf32>
    %20 = arith.truncf %19 : vector<8x128xf32> to vector<8x128xbf16>
    %c0_15 = arith.constant 0 : index
    %c256 = arith.constant 256 : index
    %21 = vector.load %arg1[%c0_15, %c256] : memref<128x384xbf16, #tpu.memory_space<vmem>>, vector<128x128xbf16>
    %cst_16 = arith.constant dense<0.000000e+00> : vector<8x128xf32>
    %22 = tpu.matmul %20, %21, %cst_16 {dimension_numbers = #tpu.dot_dimension_numbers<[1], [0], [0], [1], [0, 0, 1, 1], [], []>} : vector<8x128xbf16>, vector<128x128xbf16>, vector<8x128xf32> -> vector<8x128xf32>
    %c0_17 = arith.constant 0 : index
    %c0_18 = arith.constant 0 : index
    %23 = vector.load %arg2[%c0_17, %c0_18] : memref<8x128xf32, #tpu.memory_space<vmem>>, vector<8x128xf32>
    tpu.vector_store %arg2[%c0_17, %c0_18], %22 {strides = array<i32>} : memref<8x128xf32, #tpu.memory_space<vmem>>, vector<8x128xf32>,
    return
  }
}

</mosaic_0001>

<llo_original>
// kernel: actor_critic_forward.1
$region0: #{actor_critic_forward.1}
  #allocation0 [shape = 'u32[]', space=smem, size = 0x4, offset = 0x4, fixed_abs, tag = 'smem constant byte address 0x4 - core index']
  #allocation1 [shape = 'u32[144,128]{1,0:T(1,128)}', space=vmem, size = 0x12000, scoped, tag = 'internal scratch']
  #allocation2 [shape = 'f32[8,128]{1,0:T(8,128)}', space=vmem, size = 0x1000, scoped, tag = 'scratch operand']
  %s0 = inlined_call_operand.hbm [shape: f32[2,4], index: 0, kind: input, shape index: {}]
  %s1 = inlined_call_operand.hbm [shape: bf16[128,384], index: 1, kind: input, shape index: {}]
  %s2 = inlined_call_operand.hbm [shape: f32[8,128], index: 2, kind: output, shape index: {}]
  %s3 = sld [smem:[#allocation0]]
  $region26: #{actor_critic_forward.1} parent=0
    _
  %s5 = ssub.s32 1, %s3
  %s6 = scalar_select 0, %s5, %s3
  $region1: #{actor_critic_forward.1} parent=0
    #allocation3 [shape = 'u8[1024]{0}', space=vmem, size = 0x400, scoped, tag = 'input window, operand 0, single buffered']
    #allocation4 [shape = 's32[1]{0}', space=sflag, size = 0x4, scoped, tag = 'scoped memory for actor_critic_forward.1']
    #allocation5 [shape = 's32[1]{0}', space=sflag, size = 0x4, scoped, tag = 'scoped memory for actor_critic_forward.1']
    #allocation6 [shape = 'u8[98304]{0}', space=vmem, size = 0x18000, scoped, tag = 'input window, operand 1, single buffered']
    #allocation7 [shape = 's32[1]{0}', space=sflag, size = 0x4, scoped, tag = 'scoped memory for actor_critic_forward.1']
    #allocation8 [shape = 'u8[4096]{0}', space=vmem, size = 0x1000, scoped, tag = 'output window, operand 0, single buffered']
    %7 = vsyncpa [#allocation4], 0
    %8 = vsyncpa [#allocation7], 0
    %9 = vsyncpa [#allocation5], 0
    // Predicated region
    $region2: #{actor_critic_forward.1} parent=1 // pred_check
      _
    $region3: #{actor_critic_forward.1} parent=1 // pred_check_branch
      %11 = sbr.rel (0) target = $region5
    $region4: #{actor_critic_forward.1} parent=1 // pred_region
      %s13 = ssub.s32 32, 32
      %14 = vsyncadd [#allocation4], %s13
      %s16 = sshll.u32 [#allocation3], 4
      %s17 = int_to_ptr.vmem [resolvable:$true] %s16
      %19 = dma.hbm_to_vmem [thread:$0]  %s0, 32, %s17, [#allocation4]
    $region5: #{actor_critic_forward.1} parent=1 // pred_fallthru
      _
    // Predicated region
    $region6: #{actor_critic_forward.1} parent=1 // pred_check
      _
    $region7: #{actor_critic_forward.1} parent=1 // pred_check_branch
      %21 = sbr.rel (0) target = $region9
    $region8: #{actor_critic_forward.1} parent=1 // pred_region
      %s23 = ssub.s32 3072, 3072
      %24 = vsyncadd [#allocation7], %s23
      %s25 = sshll.u32 [#allocation6], 4
      %s26 = int_to_ptr.vmem [resolvable:$true] %s25
      %31 = dma.hbm_to_vmem [thread:$0]  %s1, 3072, %s26, [#allocation7], 192, 192, 12
    $region9: #{actor_critic_forward.1} parent=1 // pred_fallthru
      _
    // Predicated region
    $region10: #{actor_critic_forward.1} parent=1 // pred_check
      _
    $region11: #{actor_critic_forward.1} parent=1 // pred_check_branch
      %33 = sbr.rel (0) target = $region13
    $region12: #{actor_critic_forward.1} parent=1 // pred_region
      %34 = dma.done [#allocation4], 32
    $region13: #{actor_critic_forward.1} parent=1 // pred_fallthru
      _
    // Predicated region
    $region14: #{actor_critic_forward.1} parent=1 // pred_check
      _
    $region15: #{actor_critic_forward.1} parent=1 // pred_check_branch
      %36 = sbr.rel (0) target = $region17
    $region16: #{actor_critic_forward.1} parent=1 // pred_region
      %37 = dma.done [#allocation7], 3072
    $region17: #{actor_critic_forward.1} parent=1 // pred_fallthru
      _
    %v39 = vlaneseq
    %v40 = vand.u32 %v39, 127
    %vm41 = vcmp.eq.s32.totalorder %v40, 4
    %v42 = vsel %vm41, 1.0, 0.0
    %43 = vst [vmem:[#allocation2] sm:$0xff] %v42
    %v44 = vld [vmem:[#allocation3] sm:$0x3]
    %vm45 = vcmask 25600
    %46 = vst.msk [vmem:[#allocation2] sm:$0x3] %vm45, %v44
    %v47 = vld [vmem:[#allocation2] sm:$0xff]
    %v48 = vpack.c.bf16 %v47, %v47
    %v49 = vld [vmem:[#allocation6] sm:$0xf]
    %v50 = vld [vmem:[#allocation6 + $0xc] sm:$0xf]
    %v51 = vld [vmem:[#allocation6 + $0x18] sm:$0xf]
    %v52 = vld [vmem:[#allocation6 + $0x24] sm:$0xf]
    %v53 = vld [vmem:[#allocation6 + $0x30] sm:$0xf]
    %v54 = vld [vmem:[#allocation6 + $0x3c] sm:$0xf]
    %v55 = vld [vmem:[#allocation6 + $0x48] sm:$0xf]
    %v56 = vld [vmem:[#allocation6 + $0x54] sm:$0xf]
    %v57 = vld [vmem:[#allocation6 + $0x60] sm:$0xf]
    %v58 = vld [vmem:[#allocation6 + $0x6c] sm:$0xf]
    %v59 = vld [vmem:[#allocation6 + $0x78] sm:$0xf]
    %v60 = vld [vmem:[#allocation6 + $0x84] sm:$0xf]
    %v61 = vld [vmem:[#allocation6 + $0x90] sm:$0xf]
    %v62 = vld [vmem:[#allocation6 + $0x9c] sm:$0xf]
    %v63 = vld [vmem:[#allocation6 + $0xa8] sm:$0xf]
    %v64 = vld [vmem:[#allocation6 + $0xb4] sm:$0xf]
    %v81 = vunpack.c.l.b16 %v49
    %v82 = vunpack.c.l.b16 %v50
    %v83 = vunpack.c.l.b16 %v51
    %v84 = vunpack.c.l.b16 %v52
    %v85 = vunpack.c.l.b16 %v53
    %v86 = vunpack.c.l.b16 %v54
    %v87 = vunpack.c.l.b16 %v55
    %v88 = vunpack.c.l.b16 %v56
    %v89 = vunpack.c.l.b16 %v57
    %v90 = vunpack.c.l.b16 %v58
    %v91 = vunpack.c.l.b16 %v59
    %v92 = vunpack.c.l.b16 %v60
    %v93 = vunpack.c.l.b16 %v61
    %v94 = vunpack.c.l.b16 %v62
    %v95 = vunpack.c.l.b16 %v63
    %v96 = vunpack.c.l.b16 %v64
    %v97 = vpack.c.b16 %v82, %v81
    %v98 = vpack.c.b16 %v84, %v83
    %v99 = vpack.c.b16 %v86, %v85
    %v100 = vpack.c.b16 %v88, %v87
    %v101 = vpack.c.b16 %v90, %v89
    %v102 = vpack.c.b16 %v92, %v91
    %v103 = vpack.c.b16 %v94, %v93
    %v104 = vpack.c.b16 %v96, %v95
    %113 = vmatprep.subr.bf16.mxu0 0
    %114 = vmatpush1.bf16.msra.mxu0 %v97
    %115 = vmatprep.subr.bf16.mxu0 0
    %116 = vmatpush1.bf16.msra.mxu0 %v98
    %117 = vmatprep.subr.bf16.mxu0 0
    %118 = vmatpush1.bf16.msra.mxu0 %v99
    %119 = vmatprep.subr.bf16.mxu0 0
    %120 = vmatpush1.bf16.msra.mxu0 %v100
    %121 = vmatprep.subr.bf16.mxu0 0
    %122 = vmatpush1.bf16.msra.mxu0 %v101
    %123 = vmatprep.subr.bf16.mxu0 0
    %124 = vmatpush1.bf16.msra.mxu0 %v102
    %125 = vmatprep.subr.bf16.mxu0 0
    %126 = vmatpush1.bf16.msra.mxu0 %v103
    %127 = vmatprep.subr.bf16.mxu0 0
    %128 = vmatpush1.bf16.msra.mxu0 %v104
    %129 = vmatprep.subr.bf16.mxu0 0
    %130 = vmatpush1.bf16.msra.mxu0 0
    %131 = vmatprep.subr.bf16.mxu0 0
    %132 = vmatpush1.bf16.msra.mxu0 0
    %133 = vmatprep.subr.bf16.mxu0 0
    %134 = vmatpush1.bf16.msra.mxu0 0
    %135 = vmatprep.subr.bf16.mxu0 0
    %136 = vmatpush1.bf16.msra.mxu0 0
    %137 = vmatprep.subr.bf16.mxu0 0
    %138 = vmatpush1.bf16.msra.mxu0 0
    %139 = vmatprep.subr.bf16.mxu0 0
    %140 = vmatpush1.bf16.msra.mxu0 0
    %141 = vmatprep.subr.bf16.mxu0 0
    %142 = vmatpush1.bf16.msra.mxu0 0
    %143 = vmatprep.subr.bf16.mxu0 0
    %144 = vmatpush1.bf16.msra.mxu0 0
    %145 = vmatprep.mubr.bf16.mxu0 0
    %146 = vmatmul.mubr.bf16.gmra.mrb[0].mxu0 %v48
    %v147 = vpop.f32.mrb[0].mxu0
    %v148 = vadd.f32 0.0, %v147
    %v149 = vpop.f32.mrb[0].mxu0
    %v150 = vpop.f32.mrb[0].mxu0
    %v151 = vpop.f32.mrb[0].mxu0
    %152 = vdwg.mxu0
    %v153 = vmax.f32 %v148, 0.0
    %v154 = vpack.c.bf16 %v153, %v153
    %v155 = vld [vmem:[#allocation6 + $0x4] sm:$0xf]
    %v156 = vld [vmem:[#allocation6 + $0x10] sm:$0xf]
    %v157 = vld [vmem:[#allocation6 + $0x1c] sm:$0xf]
    %v158 = vld [vmem:[#allocation6 + $0x28] sm:$0xf]
    %v159 = vld [vmem:[#allocation6 + $0x34] sm:$0xf]
    %v160 = vld [vmem:[#allocation6 + $0x40] sm:$0xf]
    %v161 = vld [vmem:[#allocation6 + $0x4c] sm:$0xf]
    %v162 = vld [vmem:[#allocation6 + $0x58] sm:$0xf]
    %v163 = vld [vmem:[#allocation6 + $0x64] sm:$0xf]
    %v164 = vld [vmem:[#allocation6 + $0x70] sm:$0xf]
    %v165 = vld [vmem:[#allocation6 + $0x7c] sm:$0xf]
    %v166 = vld [vmem:[#allocation6 + $0x88] sm:$0xf]
    %v167 = vld [vmem:[#allocation6 + $0x94] sm:$0xf]
    %v168 = vld [vmem:[#allocation6 + $0xa0] sm:$0xf]
    %v169 = vld [vmem:[#allocation6 + $0xac] sm:$0xf]
    %v170 = vld [vmem:[#allocation6 + $0xb8] sm:$0xf]
    %v187 = vunpack.c.l.b16 %v155
    %v188 = vunpack.c.l.b16 %v156
    %v189 = vunpack.c.l.b16 %v157
    %v190 = vunpack.c.l.b16 %v158
    %v191 = vunpack.c.l.b16 %v159
    %v192 = vunpack.c.l.b16 %v160
    %v193 = vunpack.c.l.b16 %v161
    %v194 = vunpack.c.l.b16 %v162
    %v195 = vunpack.c.l.b16 %v163
    %v196 = vunpack.c.l.b16 %v164
    %v197 = vunpack.c.l.b16 %v165
    %v198 = vunpack.c.l.b16 %v166
    %v199 = vunpack.c.l.b16 %v167
    %v200 = vunpack.c.l.b16 %v168
    %v201 = vunpack.c.l.b16 %v169
    %v202 = vunpack.c.l.b16 %v170
    %v203 = vpack.c.b16 %v188, %v187
    %v204 = vpack.c.b16 %v190, %v189
    %v205 = vpack.c.b16 %v192, %v191
    %v206 = vpack.c.b16 %v194, %v193
    %v207 = vpack.c.b16 %v196, %v195
    %v208 = vpack.c.b16 %v198, %v197
    %v209 = vpack.c.b16 %v200, %v199
    %v210 = vpack.c.b16 %v202, %v201
    %219 = vmatprep.subr.bf16.mxu0 0
    %220 = vmatpush1.bf16.msra.mxu0 %v203
    %221 = vmatprep.subr.bf16.mxu0 0
    %222 = vmatpush1.bf16.msra.mxu0 %v204
    %223 = vmatprep.subr.bf16.mxu0 0
    %224 = vmatpush1.bf16.msra.mxu0 %v205
    %225 = vmatprep.subr.bf16.mxu0 0
    %226 = vmatpush1.bf16.msra.mxu0 %v206
    %227 = vmatprep.subr.bf16.mxu0 0
    %228 = vmatpush1.bf16.msra.mxu0 %v207
    %229 = vmatprep.subr.bf16.mxu0 0
    %230 = vmatpush1.bf16.msra.mxu0 %v208
    %231 = vmatprep.subr.bf16.mxu0 0
    %232 = vmatpush1.bf16.msra.mxu0 %v209
    %233 = vmatprep.subr.bf16.mxu0 0
    %234 = vmatpush1.bf16.msra.mxu0 %v210
    %235 = vmatprep.subr.bf16.mxu0 0
    %236 = vmatpush1.bf16.msra.mxu0 0
    %237 = vmatprep.subr.bf16.mxu0 0
    %238 = vmatpush1.bf16.msra.mxu0 0
    %239 = vmatprep.subr.bf16.mxu0 0
    %240 = vmatpush1.bf16.msra.mxu0 0
    %241 = vmatprep.subr.bf16.mxu0 0
    %242 = vmatpush1.bf16.msra.mxu0 0
    %243 = vmatprep.subr.bf16.mxu0 0
    %244 = vmatpush1.bf16.msra.mxu0 0
    %245 = vmatprep.subr.bf16.mxu0 0
    %246 = vmatpush1.bf16.msra.mxu0 0
    %247 = vmatprep.subr.bf16.mxu0 0
    %248 = vmatpush1.bf16.msra.mxu0 0
    %249 = vmatprep.subr.bf16.mxu0 0
    %250 = vmatpush1.bf16.msra.mxu0 0
    %251 = vmatprep.mubr.bf16.mxu0 0
    %252 = vmatmul.mubr.bf16.gmra.mrb[0].mxu0 %v154
    %v253 = vpop.f32.mrb[0].mxu0
    %v254 = vadd.f32 0.0, %v253
    %v255 = vpop.f32.mrb[0].mxu0
    %v256 = vpop.f32.mrb[0].mxu0
    %v257 = vpop.f32.mrb[0].mxu0
    %258 = vdwg.mxu0
    %v259 = vmax.f32 %v254, 0.0
    %v260 = vpack.c.bf16 %v259, %v259
    %v261 = vld [vmem:[#allocation6 + $0x8] sm:$0xf]
    %v262 = vld [vmem:[#allocation6 + $0x14] sm:$0xf]
    %v263 = vld [vmem:[#allocation6 + $0x20] sm:$0xf]
    %v264 = vld [vmem:[#allocation6 + $0x2c] sm:$0xf]
    %v265 = vld [vmem:[#allocation6 + $0x38] sm:$0xf]
    %v266 = vld [vmem:[#allocation6 + $0x44] sm:$0xf]
    %v267 = vld [vmem:[#allocation6 + $0x50] sm:$0xf]
    %v268 = vld [vmem:[#allocation6 + $0x5c] sm:$0xf]
    %v269 = vld [vmem:[#allocation6 + $0x68] sm:$0xf]
    %v270 = vld [vmem:[#allocation6 + $0x74] sm:$0xf]
    %v271 = vld [vmem:[#allocation6 + $0x80] sm:$0xf]
    %v272 = vld [vmem:[#allocation6 + $0x8c] sm:$0xf]
    %v273 = vld [vmem:[#allocation6 + $0x98] sm:$0xf]
    %v274 = vld [vmem:[#allocation6 + $0xa4] sm:$0xf]
    %v275 = vld [vmem:[#allocation6 + $0xb0] sm:$0xf]
    %v276 = vld [vmem:[#allocation6 + $0xbc] sm:$0xf]
    %v293 = vunpack.c.l.b16 %v261
    %v294 = vunpack.c.l.b16 %v262
    %v295 = vunpack.c.l.b16 %v263
    %v296 = vunpack.c.l.b16 %v264
    %v297 = vunpack.c.l.b16 %v265
    %v298 = vunpack.c.l.b16 %v266
    %v299 = vunpack.c.l.b16 %v267
    %v300 = vunpack.c.l.b16 %v268
    %v301 = vunpack.c.l.b16 %v269
    %v302 = vunpack.c.l.b16 %v270
    %v303 = vunpack.c.l.b16 %v271
    %v304 = vunpack.c.l.b16 %v272
    %v305 = vunpack.c.l.b16 %v273
    %v306 = vunpack.c.l.b16 %v274
    %v307 = vunpack.c.l.b16 %v275
    %v308 = vunpack.c.l.b16 %v276
    %v309 = vpack.c.b16 %v294, %v293
    %v310 = vpack.c.b16 %v296, %v295
    %v311 = vpack.c.b16 %v298, %v297
    %v312 = vpack.c.b16 %v300, %v299
    %v313 = vpack.c.b16 %v302, %v301
    %v314 = vpack.c.b16 %v304, %v303
    %v315 = vpack.c.b16 %v306, %v305
    %v316 = vpack.c.b16 %v308, %v307
    %325 = vmatprep.subr.bf16.mxu0 0
    %326 = vmatpush1.bf16.msra.mxu0 %v309
    %327 = vmatprep.subr.bf16.mxu0 0
    %328 = vmatpush1.bf16.msra.mxu0 %v310
    %329 = vmatprep.subr.bf16.mxu0 0
    %330 = vmatpush1.bf16.msra.mxu0 %v311
    %331 = vmatprep.subr.bf16.mxu0 0
    %332 = vmatpush1.bf16.msra.mxu0 %v312
    %333 = vmatprep.subr.bf16.mxu0 0
    %334 = vmatpush1.bf16.msra.mxu0 %v313
    %335 = vmatprep.subr.bf16.mxu0 0
    %336 = vmatpush1.bf16.msra.mxu0 %v314
    %337 = vmatprep.subr.bf16.mxu0 0
    %338 = vmatpush1.bf16.msra.mxu0 %v315
    %339 = vmatprep.subr.bf16.mxu0 0
    %340 = vmatpush1.bf16.msra.mxu0 %v316
    %341 = vmatprep.subr.bf16.mxu0 0
    %342 = vmatpush1.bf16.msra.mxu0 0
    %343 = vmatprep.subr.bf16.mxu0 0
    %344 = vmatpush1.bf16.msra.mxu0 0
    %345 = vmatprep.subr.bf16.mxu0 0
    %346 = vmatpush1.bf16.msra.mxu0 0
    %347 = vmatprep.subr.bf16.mxu0 0
    %348 = vmatpush1.bf16.msra.mxu0 0
    %349 = vmatprep.subr.bf16.mxu0 0
    %350 = vmatpush1.bf16.msra.mxu0 0
    %351 = vmatprep.subr.bf16.mxu0 0
    %352 = vmatpush1.bf16.msra.mxu0 0
    %353 = vmatprep.subr.bf16.mxu0 0
    %354 = vmatpush1.bf16.msra.mxu0 0
    %355 = vmatprep.subr.bf16.mxu0 0
    %356 = vmatpush1.bf16.msra.mxu0 0
    %357 = vmatprep.mubr.bf16.mxu0 0
    %358 = vmatmul.mubr.bf16.gmra.mrb[0].mxu0 %v260
    %v359 = vpop.f32.mrb[0].mxu0
    %v360 = vadd.f32 0.0, %v359
    %v361 = vpop.f32.mrb[0].mxu0
    %v362 = vpop.f32.mrb[0].mxu0
    %v363 = vpop.f32.mrb[0].mxu0
    %364 = vdwg.mxu0
    %365 = vst [vmem:[#allocation8] sm:$0xff] %v360
    // Predicated region
    $region18: #{actor_critic_forward.1} parent=1 // pred_check
      _
    $region19: #{actor_critic_forward.1} parent=1 // pred_check_branch
      %367 = sbr.rel (0) target = $region21
    $region20: #{actor_critic_forward.1} parent=1 // pred_region
      %s369 = ssub.s32 128, 128
      %370 = vsyncadd [#allocation5], %s369
      %s372 = sshll.u32 [#allocation8], 4
      %s373 = int_to_ptr.vmem [resolvable:$true] %s372
      %375 = dma.vmem_to_hbm [thread:$0]  %s373, 128, %s2, [#allocation5]
    $region21: #{actor_critic_forward.1} parent=1 // pred_fallthru
      _
    // Predicated region
    $region22: #{actor_critic_forward.1} parent=1 // pred_check
      _
    $region23: #{actor_critic_forward.1} parent=1 // pred_check_branch
      %377 = sbr.rel (0) target = $region25
    $region24: #{actor_critic_forward.1} parent=1 // pred_region
      %378 = dma.done [#allocation5], 128
    $region25: #{actor_critic_forward.1} parent=1 // pred_fallthru
      _
    %379 = vsyncpa [#allocation4], 1
    %380 = vsyncpa [#allocation7], 1
    %381 = vsyncpa [#allocation5], 1

</llo_original>
